<compile_context>
chip_gen: v7x
topology: tpu7x:2x2x1
jax: 0.10.0
libtpu: 0.0.40
codegen_flags: <defaults>
</compile_context>

<pallas_src>
import jax
import jax.numpy as jnp
from jax.experimental import pallas as pl
from jax.experimental.pallas import tpu as pltpu

D_IN = 32     # in_channels (stroke feature width)
D_MID = 64    # local_head output width
HIDDEN = 64   # hidden_channels (module default)


def _kernel(x_ref, s_ref, w12t_ref, bw_ref, b3_ref, o_ref):
    # Stroke gating:  x + x * mask  ==  x * (1 + mask)   (natural (tile_m, 32) layout,
    # gate column (tile_m, 1) broadcast along lanes).
    xg = x_ref[...] * (1.0 + s_ref[...])                                  # (tile_m, 32)
    # TODO(synk): edge_conv (ResidualGeneralHeteroConvBlock over edge_index_dict)
    # has no in-spec definition; treated as identity on x_dict['stroke'].
    # Fused local_head + decoder[0]: one 32 -> 64 matmul, transposed result layout.
    # Contract feature axes of both operands: (64,32) x (tile_m,32)^T -> (64, tile_m).
    h = jax.lax.dot_general(w12t_ref[...], xg,
                            dimension_numbers=(((1,), (1,)), ((), ())),
                            preferred_element_type=jnp.float32)           # (64, tile_m)
    h = jnp.maximum(h + bw_ref[:, 0:1], 0.0)                              # decoder[1] ReLU
    # decoder[2]: 64 -> 1 projection as VPU multiply + sublane (XLU) reduce.
    logit = jnp.sum(h * bw_ref[:, 1:2], axis=0, keepdims=True)            # (1, tile_m)
    o_ref[...] = jax.nn.sigmoid(logit + b3_ref[0]).astype(o_ref.dtype)


def _cdiv(a, b):
    return (a + b - 1) // b


def _round_up(a, b):
    return _cdiv(a, b) * b


def _choose_tile(n, max_tile_m):
    """Pick rows-per-grid-step.  Small n -> one full-extent block.  Large n ->
    tiles of <= max_tile_m rows (multiple of 128), with >= 2 grid steps so a
    v7x megacore can shard the 'parallel' axis across both TensorCores."""
    if n < 2048:
        return n, 1
    steps = max(2, _cdiv(n, max_tile_m))
    tile_m = _round_up(_cdiv(n, steps), 128)
    steps = _cdiv(n, tile_m)
    return tile_m, steps


def extruding_stroke_prediction(x, sketch_strokes_id, params, *, max_tile_m=8192):
    """x: (N, 32) f32 stroke features, sketch_strokes_id: (N, 1) gating mask.
    Returns (N, 1) f32 sigmoid probabilities."""
    w1, b1, w2, b2, w3, b3 = params
    n, d_in = x.shape
    assert d_in == D_IN

    # Trace-time algebraic fusion of the two bias-only-separated linears,
    # in full f32 precision so the fused weights match the unfused reference.
    hi = jax.lax.Precision.HIGHEST
    w12t = jnp.dot(w1, w2, precision=hi).T                    # (HIDDEN, 32)
    b12c = (jnp.dot(b1, w2, precision=hi) + b2).T             # (HIDDEN, 1)
    bw = jnp.concatenate([b12c, w3], axis=1)                  # (HIDDEN, 2) resident slab
    b3s = b3.reshape((1,))                                    # SMEM scalar

    s = sketch_strokes_id.astype(x.dtype).reshape(n, 1)

    tile_m, steps = _choose_tile(n, max_tile_m)

    out = pl.pallas_call(
        _kernel,
        out_shape=jax.ShapeDtypeStruct((1, n), jnp.float32),
        grid_spec=pltpu.PrefetchScalarGridSpec(
            num_scalar_prefetch=0,
            grid=(steps,),
            in_specs=[
                pl.BlockSpec((tile_m, D_IN), lambda i: (i, 0)),      # x, natural layout
                pl.BlockSpec((tile_m, 1), lambda i: (i, 0)),         # gating column
                pl.BlockSpec((HIDDEN, D_IN), lambda i: (0, 0)),      # fused W12^T (resident)
                pl.BlockSpec((HIDDEN, 2), lambda i: (0, 0)),         # [b12 | w3] (resident)
                pl.BlockSpec(memory_space=pltpu.MemorySpace.SMEM),   # b3 scalar
            ],
            out_specs=pl.BlockSpec((1, tile_m), lambda i: (0, i)),   # lane-dense output
        ),
        compiler_params=pltpu.CompilerParams(
            dimension_semantics=("parallel",)),
    )(x, s, w12t, bw, b3s)

    return out[0, :n].reshape(n, 1)


def init_params(key):
    """Deterministic synthetic parameters matching the PyTorch shapes.
    PyTorch stores Linear weights as (out, in); we keep them as (in, out)."""
    k1, k2, k3, k4, k5, k6 = jax.random.split(key, 6)
    w1 = jax.random.normal(k1, (D_IN, D_MID), jnp.float32) * 0.1   # local_head
    b1 = jax.random.normal(k2, (1, D_MID), jnp.float32) * 0.1
    w2 = jax.random.normal(k3, (D_MID, HIDDEN), jnp.float32) * 0.1  # decoder[0]
    b2 = jax.random.normal(k4, (1, HIDDEN), jnp.float32) * 0.1
    w3 = jax.random.normal(k5, (HIDDEN, 1), jnp.float32) * 0.1      # decoder[2]
    b3 = jax.random.normal(k6, (1, 1), jnp.float32) * 0.1
    return (w1, b1, w2, b2, w3, b3)


def reference(x, s, params):
    w1, b1, w2, b2, w3, b3 = params
    hi = jax.lax.Precision.HIGHEST
    xg = x + x * s
    h = jnp.dot(xg, w1, precision=hi) + b1
    h = jnp.maximum(jnp.dot(h, w2, precision=hi) + b2, 0.0)
    return jax.nn.sigmoid(jnp.dot(h, w3, precision=hi) + b3)


if __name__ == "__main__":
    key = jax.random.PRNGKey(0)
    k_x, k_s, k_p = jax.random.split(key, 3)
    params = init_params(k_p)

    # Small single-block case (one full-extent tile).
    N = 256
    x = jax.random.normal(k_x, (N, D_IN), jnp.float32)                 # x_dict['stroke']
    sketch_strokes_id = jax.random.bernoulli(k_s, 0.3, (N, 1)).astype(jnp.float32)
    out = extruding_stroke_prediction(x, sketch_strokes_id, params)
    jax.block_until_ready(out)
    ref = reference(x, sketch_strokes_id, params)
    assert out.shape == (N, 1)
    assert jnp.allclose(out, ref, atol=2e-5, rtol=1e-4), "mismatch vs reference (N=256)"

    # Multi-step grid with a ragged tail block (exercises >= 2 parallel steps).
    N2 = 2500
    x2 = jax.random.normal(jax.random.PRNGKey(1), (N2, D_IN), jnp.float32)
    s2 = jax.random.bernoulli(jax.random.PRNGKey(2), 0.3, (N2, 1)).astype(jnp.float32)
    out2 = extruding_stroke_prediction(x2, s2, params)
    jax.block_until_ready(out2)
    ref2 = reference(x2, s2, params)
    assert out2.shape == (N2, 1)
    assert jnp.allclose(out2, ref2, atol=2e-5, rtol=1e-4), "mismatch vs reference (N=2500)"

    print("KERNEL_OK")
</pallas_src>

<mosaic_0001>
module attributes {stable_mosaic.version = 11 : i64} {
  func.func @_kernel(%arg0: i32, %arg1: memref<256x32xf32, #tpu.memory_space<vmem>>, %arg2: memref<256x1xf32, #tpu.memory_space<vmem>>, %arg3: memref<64x32xf32, #tpu.memory_space<vmem>>, %arg4: memref<64x2xf32, #tpu.memory_space<vmem>>, %arg5: memref<1xf32, #tpu.memory_space<smem>>, %arg6: memref<1x256xf32, #tpu.memory_space<vmem>>) attributes {dimension_semantics = [#tpu.dimension_semantics<parallel>], iteration_bounds = array<i64: 1>, scalar_prefetch = 0 : i64, scratch_operands = 0 : i64, tpu.core_type = #tpu.core_type<tc>, window_params = [{transform_indices = @transform_0, window_bounds = array<i64: 256, 32>}, {transform_indices = @transform_1, window_bounds = array<i64: 256, 1>}, {pipeline_mode = #tpu.pipeline_mode<synchronous>, transform_indices = @transform_2, window_bounds = array<i64: 64, 32>}, {pipeline_mode = #tpu.pipeline_mode<synchronous>, transform_indices = @transform_3, window_bounds = array<i64: 64, 2>}, {transform_indices = @transform_4, window_bounds = array<i64: 1>}, {transform_indices = @transform_5, window_bounds = array<i64: 1, 256>}]} {
    %c0 = arith.constant 0 : index
    %c0_0 = arith.constant 0 : index
    %0 = vector.load %arg1[%c0, %c0_0] : memref<256x32xf32, #tpu.memory_space<vmem>>, vector<256x32xf32>
    %c0_1 = arith.constant 0 : index
    %c0_2 = arith.constant 0 : index
    %1 = vector.load %arg2[%c0_1, %c0_2] : memref<256x1xf32, #tpu.memory_space<vmem>>, vector<256x1xf32>
    %cst = arith.constant 1.000000e+00 : f32
    %2 = vector.broadcast %cst : f32 to vector<256x1xf32>
    %3 = arith.addf %2, %1 : vector<256x1xf32>
    %4 = vector.broadcast %3 : vector<256x1xf32> to vector<256x32xf32>
    %5 = arith.mulf %0, %4 : vector<256x32xf32>
    %c0_3 = arith.constant 0 : index
    %c0_4 = arith.constant 0 : index
    %6 = vector.load %arg3[%c0_3, %c0_4] : memref<64x32xf32, #tpu.memory_space<vmem>>, vector<64x32xf32>
    %cst_5 = arith.constant dense<0.000000e+00> : vector<64x256xf32>
    %7 = tpu.matmul %6, %5, %cst_5 {dimension_numbers = #tpu.dot_dimension_numbers<[1], [1], [0], [0], [0, 0, 1, 0], [], []>} : vector<64x32xf32>, vector<256x32xf32>, vector<64x256xf32> -> vector<64x256xf32>
    %c0_6 = arith.constant 0 : index
    %c0_7 = arith.constant 0 : index
    %8 = vector.load %arg4[%c0_6, %c0_7] : memref<64x2xf32, #tpu.memory_space<vmem>>, vector<64x1xf32>
    %9 = vector.broadcast %8 : vector<64x1xf32> to vector<64x256xf32>
    %10 = arith.addf %7, %9 : vector<64x256xf32>
    %cst_8 = arith.constant 0.000000e+00 : f32
    %11 = vector.broadcast %cst_8 : f32 to vector<64x256xf32>
    %12 = arith.maximumf %10, %11 : vector<64x256xf32>
    %c0_9 = arith.constant 0 : index
    %c1 = arith.constant 1 : index
    %13 = vector.load %arg4[%c0_9, %c1] : memref<64x2xf32, #tpu.memory_space<vmem>>, vector<64x1xf32>
    %14 = vector.broadcast %13 : vector<64x1xf32> to vector<64x256xf32>
    %15 = arith.mulf %12, %14 : vector<64x256xf32>
    %cst_10 = arith.constant dense<0.000000e+00> : vector<256xf32>
    %16 = vector.multi_reduction <add>, %15, %cst_10 [0] : vector<64x256xf32> to vector<256xf32>
    %17 = vector.shape_cast %16 : vector<256xf32> to vector<1x256xf32>
    %c0_11 = arith.constant 0 : index
    %18 = memref.load %arg5[%c0_11] : memref<1xf32, #tpu.memory_space<smem>>
    %19 = vector.broadcast %18 : f32 to vector<1x256xf32>
    %20 = arith.addf %17, %19 : vector<1x256xf32>
    %21 = arith.negf %20 : vector<1x256xf32>
    %22 = math.exp %21 : vector<1x256xf32>
    %cst_12 = arith.constant 1.000000e+00 : f32
    %23 = vector.broadcast %cst_12 : f32 to vector<1x256xf32>
    %24 = arith.addf %23, %22 : vector<1x256xf32>
    %25 = arith.divf %23, %24 : vector<1x256xf32>
    %c0_13 = arith.constant 0 : index
    %c0_14 = arith.constant 0 : index
    %26 = vector.load %arg6[%c0_13, %c0_14] : memref<1x256xf32, #tpu.memory_space<vmem>>, vector<1x256xf32>
    tpu.vector_store %arg6[%c0_13, %c0_14], %25 {strides = array<i32>} : memref<1x256xf32, #tpu.memory_space<vmem>>, vector<1x256xf32>,
    return
  }
  func.func @transform_0(%arg0: i32) -> (i32, i32) {
    %c0_i32 = arith.constant 0 : i32
    %c0_i32_0 = arith.constant 0 : i32
    return %arg0, %c0_i32 : i32, i32
  }
  func.func @transform_1(%arg0: i32) -> (i32, i32) {
    %c0_i32 = arith.constant 0 : i32
    %c0_i32_0 = arith.constant 0 : i32
    return %arg0, %c0_i32 : i32, i32
  }
  func.func @transform_2(%arg0: i32) -> (i32, i32) {
    %c0_i32 = arith.constant 0 : i32
    %c0_i32_0 = arith.constant 0 : i32
    %c0_i32_1 = arith.constant 0 : i32
    return %c0_i32, %c0_i32_0 : i32, i32
  }
  func.func @transform_3(%arg0: i32) -> (i32, i32) {
    %c0_i32 = arith.constant 0 : i32
    %c0_i32_0 = arith.constant 0 : i32
    %c0_i32_1 = arith.constant 0 : i32
    return %c0_i32, %c0_i32_0 : i32, i32
  }
  func.func @transform_4(%arg0: i32) -> i32 {
    %c0_i32 = arith.constant 0 : i32
    %c0_i32_0 = arith.constant 0 : i32
    return %c0_i32 : i32
  }
  func.func @transform_5(%arg0: i32) -> (i32, i32) {
    %c0_i32 = arith.constant 0 : i32
    %c0_i32_0 = arith.constant 0 : i32
    return %c0_i32, %arg0 : i32, i32
  }
}

</mosaic_0001>

<llo_original>
// kernel: tpu_custom_call.1
$region0: #{tpu_custom_call.1}
  #allocation0 [shape = 'u32[]', space=smem, size = 0x4, offset = 0x4, fixed_abs, tag = 'smem constant byte address 0x4 - core index']
  #allocation1 [shape = 'u32[144,128]{1,0:T(1,128)}', space=vmem, size = 0x12000, scoped, tag = 'internal scratch']
  #allocation2 [shape = 'f32[1]{0:T(128)S(6)}', space=smem, size = 0x200, scoped, tag = 'scoped memory for tpu_custom_call.1']
  %s0 = inlined_call_operand.vmem [shape: f32[256,32], index: 0, kind: input, shape index: {}]
  %s1 = inlined_call_operand.vmem [shape: f32[256,1], index: 1, kind: input, shape index: {}]
  %s2 = inlined_call_operand.vmem [shape: f32[64,32], index: 2, kind: input, shape index: {}]
  %s3 = inlined_call_operand.vmem [shape: f32[64,2], index: 3, kind: input, shape index: {}]
  %s4 = inlined_call_operand.<no memory space> [shape: f32[1], index: 4, kind: input, shape index: {}]
  %s5 = inlined_call_operand.hbm [shape: f32[1,256], index: 5, kind: output, shape index: {}]
  %s6 = sld [smem:[#allocation0]]
  $region30: #{tpu_custom_call.1} parent=0
    _
  %s8 = ssub.s32 1, %s6
  %s9 = scalar_select 0, %s8, %s6
  %10 = sst [smem:[#allocation2]] %s4
  $region1: #{tpu_custom_call.1} parent=0
    #allocation3 [shape = 'u8[1024]{0}', space=vmem, size = 0x400, scoped, tag = 'output window, operand 0, single buffered']
    #allocation4 [shape = 's32[1]{0}', space=sflag, size = 0x4, scoped, tag = 'scoped memory for tpu_custom_call.1']
    %11 = vsyncpa [#allocation4], 0
    // Predicated region
    $region2: #{tpu_custom_call.1} parent=1 // pred_check
      _
    $region3: #{tpu_custom_call.1} parent=1 // pred_check_branch
      %13 = sbr.rel (0) target = $region5
    $region4: #{tpu_custom_call.1} parent=1 // pred_region
      _
    $region5: #{tpu_custom_call.1} parent=1 // pred_fallthru
      _
    // Predicated region
    $region6: #{tpu_custom_call.1} parent=1 // pred_check
      _
    $region7: #{tpu_custom_call.1} parent=1 // pred_check_branch
      %15 = sbr.rel (0) target = $region9
    $region8: #{tpu_custom_call.1} parent=1 // pred_region
      _
    $region9: #{tpu_custom_call.1} parent=1 // pred_fallthru
      _
    // Predicated region
    $region10: #{tpu_custom_call.1} parent=1 // pred_check
      _
    $region11: #{tpu_custom_call.1} parent=1 // pred_check_branch
      %17 = sbr.rel (0) target = $region13
    $region12: #{tpu_custom_call.1} parent=1 // pred_region
      _
    $region13: #{tpu_custom_call.1} parent=1 // pred_fallthru
      _
    // Predicated region
    $region14: #{tpu_custom_call.1} parent=1 // pred_check
      _
    $region15: #{tpu_custom_call.1} parent=1 // pred_check_branch
      %19 = sbr.rel (0) target = $region17
    $region16: #{tpu_custom_call.1} parent=1 // pred_region
      _
    $region17: #{tpu_custom_call.1} parent=1 // pred_fallthru
      _
    // Predicated region
    $region18: #{tpu_custom_call.1} parent=1 // pred_check
      _
    $region19: #{tpu_custom_call.1} parent=1 // pred_check_branch
      %21 = sbr.rel (0) target = $region21
    $region20: #{tpu_custom_call.1} parent=1 // pred_region
      _
    $region21: #{tpu_custom_call.1} parent=1 // pred_fallthru
      _
    %v22 = vld [vmem:[%s0] sm:$0xff]
    %v23 = vld [vmem:[%s0 + $0x8] sm:$0xff]
    %v24 = vld [vmem:[%s0 + $0x10] sm:$0xff]
    %v25 = vld [vmem:[%s0 + $0x18] sm:$0xff]
    %v26 = vld [vmem:[%s0 + $0x20] sm:$0xff]
    %v27 = vld [vmem:[%s0 + $0x28] sm:$0xff]
    %v28 = vld [vmem:[%s0 + $0x30] sm:$0xff]
    %v29 = vld [vmem:[%s0 + $0x38] sm:$0xff]
    %v30 = vld [vmem:[%s0 + $0x40] sm:$0xff]
    %v31 = vld [vmem:[%s0 + $0x48] sm:$0xff]
    %v32 = vld [vmem:[%s0 + $0x50] sm:$0xff]
    %v33 = vld [vmem:[%s0 + $0x58] sm:$0xff]
    %v34 = vld [vmem:[%s0 + $0x60] sm:$0xff]
    %v35 = vld [vmem:[%s0 + $0x68] sm:$0xff]
    %v36 = vld [vmem:[%s0 + $0x70] sm:$0xff]
    %v37 = vld [vmem:[%s0 + $0x78] sm:$0xff]
    %v38 = vld [vmem:[%s0 + $0x80] sm:$0xff]
    %v39 = vld [vmem:[%s0 + $0x88] sm:$0xff]
    %v40 = vld [vmem:[%s0 + $0x90] sm:$0xff]
    %v41 = vld [vmem:[%s0 + $0x98] sm:$0xff]
    %v42 = vld [vmem:[%s0 + $0xa0] sm:$0xff]
    %v43 = vld [vmem:[%s0 + $0xa8] sm:$0xff]
    %v44 = vld [vmem:[%s0 + $0xb0] sm:$0xff]
    %v45 = vld [vmem:[%s0 + $0xb8] sm:$0xff]
    %v46 = vld [vmem:[%s0 + $0xc0] sm:$0xff]
    %v47 = vld [vmem:[%s0 + $0xc8] sm:$0xff]
    %v48 = vld [vmem:[%s0 + $0xd0] sm:$0xff]
    %v49 = vld [vmem:[%s0 + $0xd8] sm:$0xff]
    %v50 = vld [vmem:[%s0 + $0xe0] sm:$0xff]
    %v51 = vld [vmem:[%s0 + $0xe8] sm:$0xff]
    %v52 = vld [vmem:[%s0 + $0xf0] sm:$0xff]
    %v53 = vld [vmem:[%s0 + $0xf8] sm:$0xff]
    %v54 = vld [vmem:[%s1] sm:$0xff]
    %v55 = vld [vmem:[%s1 + $0x8] sm:$0xff]
    %v56 = vld [vmem:[%s1 + $0x10] sm:$0xff]
    %v57 = vld [vmem:[%s1 + $0x18] sm:$0xff]
    %v58 = vld [vmem:[%s1 + $0x20] sm:$0xff]
    %v59 = vld [vmem:[%s1 + $0x28] sm:$0xff]
    %v60 = vld [vmem:[%s1 + $0x30] sm:$0xff]
    %v61 = vld [vmem:[%s1 + $0x38] sm:$0xff]
    %v62 = vld [vmem:[%s1 + $0x40] sm:$0xff]
    %v63 = vld [vmem:[%s1 + $0x48] sm:$0xff]
    %v64 = vld [vmem:[%s1 + $0x50] sm:$0xff]
    %v65 = vld [vmem:[%s1 + $0x58] sm:$0xff]
    %v66 = vld [vmem:[%s1 + $0x60] sm:$0xff]
    %v67 = vld [vmem:[%s1 + $0x68] sm:$0xff]
    %v68 = vld [vmem:[%s1 + $0x70] sm:$0xff]
    %v69 = vld [vmem:[%s1 + $0x78] sm:$0xff]
    %v70 = vld [vmem:[%s1 + $0x80] sm:$0xff]
    %v71 = vld [vmem:[%s1 + $0x88] sm:$0xff]
    %v72 = vld [vmem:[%s1 + $0x90] sm:$0xff]
    %v73 = vld [vmem:[%s1 + $0x98] sm:$0xff]
    %v74 = vld [vmem:[%s1 + $0xa0] sm:$0xff]
    %v75 = vld [vmem:[%s1 + $0xa8] sm:$0xff]
    %v76 = vld [vmem:[%s1 + $0xb0] sm:$0xff]
    %v77 = vld [vmem:[%s1 + $0xb8] sm:$0xff]
    %v78 = vld [vmem:[%s1 + $0xc0] sm:$0xff]
    %v79 = vld [vmem:[%s1 + $0xc8] sm:$0xff]
    %v80 = vld [vmem:[%s1 + $0xd0] sm:$0xff]
    %v81 = vld [vmem:[%s1 + $0xd8] sm:$0xff]
    %v82 = vld [vmem:[%s1 + $0xe0] sm:$0xff]
    %v83 = vld [vmem:[%s1 + $0xe8] sm:$0xff]
    %v84 = vld [vmem:[%s1 + $0xf0] sm:$0xff]
    %v85 = vld [vmem:[%s1 + $0xf8] sm:$0xff]
    %v86 = vadd.f32 %v54, 1.0
    %v87 = vadd.f32 %v55, 1.0
    %v88 = vadd.f32 %v56, 1.0
    %v89 = vadd.f32 %v57, 1.0
    %v90 = vadd.f32 %v58, 1.0
    %v91 = vadd.f32 %v59, 1.0
    %v92 = vadd.f32 %v60, 1.0
    %v93 = vadd.f32 %v61, 1.0
    %v94 = vadd.f32 %v62, 1.0
    %v95 = vadd.f32 %v63, 1.0
    %v96 = vadd.f32 %v64, 1.0
    %v97 = vadd.f32 %v65, 1.0
    %v98 = vadd.f32 %v66, 1.0
    %v99 = vadd.f32 %v67, 1.0
    %v100 = vadd.f32 %v68, 1.0
    %v101 = vadd.f32 %v69, 1.0
    %v102 = vadd.f32 %v70, 1.0
    %v103 = vadd.f32 %v71, 1.0
    %v104 = vadd.f32 %v72, 1.0
    %v105 = vadd.f32 %v73, 1.0
    %v106 = vadd.f32 %v74, 1.0
    %v107 = vadd.f32 %v75, 1.0
    %v108 = vadd.f32 %v76, 1.0
    %v109 = vadd.f32 %v77, 1.0
    %v110 = vadd.f32 %v78, 1.0
    %v111 = vadd.f32 %v79, 1.0
    %v112 = vadd.f32 %v80, 1.0
    %v113 = vadd.f32 %v81, 1.0
    %v114 = vadd.f32 %v82, 1.0
    %v115 = vadd.f32 %v83, 1.0
    %v116 = vadd.f32 %v84, 1.0
    %v117 = vadd.f32 %v85, 1.0
    %119 = vset.pattern.permute.xlu0 0
    %120 = vperm.xlu0 %119, %v86
    %v121 = vpop.permute.xlu0 %120
    %124 = vset.pattern.permute.xlu0 0
    %125 = vperm.xlu0 %124, %v87
    %v126 = vpop.permute.xlu0 %125
    %129 = vset.pattern.permute.xlu0 0
    %130 = vperm.xlu0 %129, %v88
    %v131 = vpop.permute.xlu0 %130
    %134 = vset.pattern.permute.xlu0 0
    %135 = vperm.xlu0 %134, %v89
    %v136 = vpop.permute.xlu0 %135
    %139 = vset.pattern.permute.xlu0 0
    %140 = vperm.xlu0 %139, %v90
    %v141 = vpop.permute.xlu0 %140
    %144 = vset.pattern.permute.xlu0 0
    %145 = vperm.xlu0 %144, %v91
    %v146 = vpop.permute.xlu0 %145
    %149 = vset.pattern.permute.xlu0 0
    %150 = vperm.xlu0 %149, %v92
    %v151 = vpop.permute.xlu0 %150
    %154 = vset.pattern.permute.xlu0 0
    %155 = vperm.xlu0 %154, %v93
    %v156 = vpop.permute.xlu0 %155
    %159 = vset.pattern.permute.xlu0 0
    %160 = vperm.xlu0 %159, %v94
    %v161 = vpop.permute.xlu0 %160
    %164 = vset.pattern.permute.xlu0 0
    %165 = vperm.xlu0 %164, %v95
    %v166 = vpop.permute.xlu0 %165
    %169 = vset.pattern.permute.xlu0 0
    %170 = vperm.xlu0 %169, %v96
    %v171 = vpop.permute.xlu0 %170
    %174 = vset.pattern.permute.xlu0 0
    %175 = vperm.xlu0 %174, %v97
    %v176 = vpop.permute.xlu0 %175
    %179 = vset.pattern.permute.xlu0 0
    %180 = vperm.xlu0 %179, %v98
    %v181 = vpop.permute.xlu0 %180
    %184 = vset.pattern.permute.xlu0 0
    %185 = vperm.xlu0 %184, %v99
    %v186 = vpop.permute.xlu0 %185
    %189 = vset.pattern.permute.xlu0 0
    %190 = vperm.xlu0 %189, %v100
    %v191 = vpop.permute.xlu0 %190
    %194 = vset.pattern.permute.xlu0 0
    %195 = vperm.xlu0 %194, %v101
    %v196 = vpop.permute.xlu0 %195
    %199 = vset.pattern.permute.xlu0 0
    %200 = vperm.xlu0 %199, %v102
    %v201 = vpop.permute.xlu0 %200
    %204 = vset.pattern.permute.xlu0 0
    %205 = vperm.xlu0 %204, %v103
    %v206 = vpop.permute.xlu0 %205
    %209 = vset.pattern.permute.xlu0 0
    %210 = vperm.xlu0 %209, %v104
    %v211 = vpop.permute.xlu0 %210
    %214 = vset.pattern.permute.xlu0 0
    %215 = vperm.xlu0 %214, %v105
    %v216 = vpop.permute.xlu0 %215
    %219 = vset.pattern.permute.xlu0 0
    %220 = vperm.xlu0 %219, %v106
    %v221 = vpop.permute.xlu0 %220
    %224 = vset.pattern.permute.xlu0 0
    %225 = vperm.xlu0 %224, %v107
    %v226 = vpop.permute.xlu0 %225
    %229 = vset.pattern.permute.xlu0 0
    %230 = vperm.xlu0 %229, %v108
    %v231 = vpop.permute.xlu0 %230
    %234 = vset.pattern.permute.xlu0 0
    %235 = vperm.xlu0 %234, %v109
    %v236 = vpop.permute.xlu0 %235
    %239 = vset.pattern.permute.xlu0 0
    %240 = vperm.xlu0 %239, %v110
    %v241 = vpop.permute.xlu0 %240
    %244 = vset.pattern.permute.xlu0 0
    %245 = vperm.xlu0 %244, %v111
    %v246 = vpop.permute.xlu0 %245
    %249 = vset.pattern.permute.xlu0 0
    %250 = vperm.xlu0 %249, %v112
    %v251 = vpop.permute.xlu0 %250
    %254 = vset.pattern.permute.xlu0 0
    %255 = vperm.xlu0 %254, %v113
    %v256 = vpop.permute.xlu0 %255
    %259 = vset.pattern.permute.xlu0 0
    %260 = vperm.xlu0 %259, %v114
    %v261 = vpop.permute.xlu0 %260
    %264 = vset.pattern.permute.xlu0 0
    %265 = vperm.xlu0 %264, %v115
    %v266 = vpop.permute.xlu0 %265
    %269 = vset.pattern.permute.xlu0 0
    %270 = vperm.xlu0 %269, %v116
    %v271 = vpop.permute.xlu0 %270
    %274 = vset.pattern.permute.xlu0 0
    %275 = vperm.xlu0 %274, %v117
    %v276 = vpop.permute.xlu0 %275
    %v278 = vmul.f32 %v22, %v121
    %v279 = vmul.f32 %v23, %v126
    %v280 = vmul.f32 %v24, %v131
    %v281 = vmul.f32 %v25, %v136
    %v282 = vmul.f32 %v26, %v141
    %v283 = vmul.f32 %v27, %v146
    %v284 = vmul.f32 %v28, %v151
    %v285 = vmul.f32 %v29, %v156
    %v286 = vmul.f32 %v30, %v161
    %v287 = vmul.f32 %v31, %v166
    %v288 = vmul.f32 %v32, %v171
    %v289 = vmul.f32 %v33, %v176
    %v290 = vmul.f32 %v34, %v181
    %v291 = vmul.f32 %v35, %v186
    %v292 = vmul.f32 %v36, %v191
    %v293 = vmul.f32 %v37, %v196
    %v294 = vmul.f32 %v38, %v201
    %v295 = vmul.f32 %v39, %v206
    %v296 = vmul.f32 %v40, %v211
    %v297 = vmul.f32 %v41, %v216
    %v298 = vmul.f32 %v42, %v221
    %v299 = vmul.f32 %v43, %v226
    %v300 = vmul.f32 %v44, %v231
    %v301 = vmul.f32 %v45, %v236
    %v302 = vmul.f32 %v46, %v241
    %v303 = vmul.f32 %v47, %v246
    %v304 = vmul.f32 %v48, %v251
    %v305 = vmul.f32 %v49, %v256
    %v306 = vmul.f32 %v50, %v261
    %v307 = vmul.f32 %v51, %v266
    %v308 = vmul.f32 %v52, %v271
    %v309 = vmul.f32 %v53, %v276
    %v310 = vld [vmem:[%s2] sm:$0xff]
    %v311 = vld [vmem:[%s2 + $0x8] sm:$0xff]
    %v312 = vld [vmem:[%s2 + $0x10] sm:$0xff]
    %v313 = vld [vmem:[%s2 + $0x18] sm:$0xff]
    %v314 = vld [vmem:[%s2 + $0x20] sm:$0xff]
    %v315 = vld [vmem:[%s2 + $0x28] sm:$0xff]
    %v316 = vld [vmem:[%s2 + $0x30] sm:$0xff]
    %v317 = vld [vmem:[%s2 + $0x38] sm:$0xff]
    %v318 = vld [vmem:[%s3] sm:$0xff]
    %v319 = vld [vmem:[%s3 + $0x8] sm:$0xff]
    %v320 = vld [vmem:[%s3 + $0x10] sm:$0xff]
    %v321 = vld [vmem:[%s3 + $0x18] sm:$0xff]
    %v322 = vld [vmem:[%s3 + $0x20] sm:$0xff]
    %v323 = vld [vmem:[%s3 + $0x28] sm:$0xff]
    %v324 = vld [vmem:[%s3 + $0x30] sm:$0xff]
    %v325 = vld [vmem:[%s3 + $0x38] sm:$0xff]
    %327 = vset.pattern.permute.xlu0 0
    %328 = vperm.xlu0 %327, %v318
    %v329 = vpop.permute.xlu0 %328
    %332 = vset.pattern.permute.xlu0 0
    %333 = vperm.xlu0 %332, %v319
    %v334 = vpop.permute.xlu0 %333
    %337 = vset.pattern.permute.xlu0 0
    %338 = vperm.xlu0 %337, %v320
    %v339 = vpop.permute.xlu0 %338
    %342 = vset.pattern.permute.xlu0 0
    %343 = vperm.xlu0 %342, %v321
    %v344 = vpop.permute.xlu0 %343
    %347 = vset.pattern.permute.xlu0 0
    %348 = vperm.xlu0 %347, %v322
    %v349 = vpop.permute.xlu0 %348
    %352 = vset.pattern.permute.xlu0 0
    %353 = vperm.xlu0 %352, %v323
    %v354 = vpop.permute.xlu0 %353
    %357 = vset.pattern.permute.xlu0 0
    %358 = vperm.xlu0 %357, %v324
    %v359 = vpop.permute.xlu0 %358
    %362 = vset.pattern.permute.xlu0 0
    %363 = vperm.xlu0 %362, %v325
    %v364 = vpop.permute.xlu0 %363
    %vm366 = vcmask 261120
    %v368 = vsel %vm366, %v310, 0
    %v371 = vsel %vm366, %v311, 0
    %v374 = vsel %vm366, %v312, 0
    %v377 = vsel %vm366, %v313, 0
    %v380 = vsel %vm366, %v314, 0
    %v383 = vsel %vm366, %v315, 0
    %v386 = vsel %vm366, %v316, 0
    %v389 = vsel %vm366, %v317, 0
    %v392 = vsel %vm366, %v278, 0
    %v395 = vsel %vm366, %v279, 0
    %v398 = vsel %vm366, %v280, 0
    %v401 = vsel %vm366, %v281, 0
    %v404 = vsel %vm366, %v282, 0
    %v407 = vsel %vm366, %v283, 0
    %v410 = vsel %vm366, %v284, 0
    %v413 = vsel %vm366, %v285, 0
    %v416 = vsel %vm366, %v286, 0
    %v419 = vsel %vm366, %v287, 0
    %v422 = vsel %vm366, %v288, 0
    %v425 = vsel %vm366, %v289, 0
    %v428 = vsel %vm366, %v290, 0
    %v431 = vsel %vm366, %v291, 0
    %v434 = vsel %vm366, %v292, 0
    %v437 = vsel %vm366, %v293, 0
    %v440 = vsel %vm366, %v294, 0
    %v443 = vsel %vm366, %v295, 0
    %v446 = vsel %vm366, %v296, 0
    %v449 = vsel %vm366, %v297, 0
    %v452 = vsel %vm366, %v298, 0
    %v455 = vsel %vm366, %v299, 0
    %v458 = vsel %vm366, %v300, 0
    %v461 = vsel %vm366, %v301, 0
    %v464 = vsel %vm366, %v302, 0
    %v467 = vsel %vm366, %v303, 0
    %v470 = vsel %vm366, %v304, 0
    %v473 = vsel %vm366, %v305, 0
    %v476 = vsel %vm366, %v306, 0
    %v479 = vsel %vm366, %v307, 0
    %v482 = vsel %vm366, %v308, 0
    %v485 = vsel %vm366, %v309, 0
    %487 = vmatprep.subr.mxu0 0.0
    %488 = vmatpush1.xpose.msra.mxu0 %v392
    %489 = vmatprep.subr.mxu0 0.0
    %490 = vmatpush1.xpose.msra.mxu0 %v395
    %491 = vmatprep.subr.mxu0 0.0
    %492 = vmatpush1.xpose.msra.mxu0 %v398
    %493 = vmatprep.subr.mxu0 0.0
    %494 = vmatpush1.xpose.msra.mxu0 %v401
    %495 = vmatprep.subr.mxu0 0.0
    %496 = vmatpush1.xpose.msra.mxu0 %v404
    %497 = vmatprep.subr.mxu0 0.0
    %498 = vmatpush1.xpose.msra.mxu0 %v407
    %499 = vmatprep.subr.mxu0 0.0
    %500 = vmatpush1.xpose.msra.mxu0 %v410
    %501 = vmatprep.subr.mxu0 0.0
    %502 = vmatpush1.xpose.msra.mxu0 %v413
    %503 = vmatprep.subr.mxu0 0.0
    %504 = vmatpush1.xpose.msra.mxu0 %v416
    %505 = vmatprep.subr.mxu0 0.0
    %506 = vmatpush1.xpose.msra.mxu0 %v419
    %507 = vmatprep.subr.mxu0 0.0
    %508 = vmatpush1.xpose.msra.mxu0 %v422
    %509 = vmatprep.subr.mxu0 0.0
    %510 = vmatpush1.xpose.msra.mxu0 %v425
    %511 = vmatprep.subr.mxu0 0.0
    %512 = vmatpush1.xpose.msra.mxu0 %v428
    %513 = vmatprep.subr.mxu0 0.0
    %514 = vmatpush1.xpose.msra.mxu0 %v431
    %515 = vmatprep.subr.mxu0 0.0
    %516 = vmatpush1.xpose.msra.mxu0 %v434
    %517 = vmatprep.subr.mxu0 0.0
    %518 = vmatpush1.xpose.msra.mxu0 %v437
    %519 = vmatprep.subr.mxu0 0.0
    %520 = vmatpush1.xpose.msra.mxu0 %v440
    %521 = vmatprep.subr.mxu0 0.0
    %522 = vmatpush1.xpose.msra.mxu0 %v443
    %523 = vmatprep.subr.mxu0 0.0
    %524 = vmatpush1.xpose.msra.mxu0 %v446
    %525 = vmatprep.subr.mxu0 0.0
    %526 = vmatpush1.xpose.msra.mxu0 %v449
    %527 = vmatprep.subr.mxu0 0.0
    %528 = vmatpush1.xpose.msra.mxu0 %v452
    %529 = vmatprep.subr.mxu0 0.0
    %530 = vmatpush1.xpose.msra.mxu0 %v455
    %531 = vmatprep.subr.mxu0 0.0
    %532 = vmatpush1.xpose.msra.mxu0 %v458
    %533 = vmatprep.subr.mxu0 0.0
    %534 = vmatpush1.xpose.msra.mxu0 %v461
    %535 = vmatprep.subr.mxu0 0.0
    %536 = vmatpush1.xpose.msra.mxu0 %v464
    %537 = vmatprep.subr.mxu0 0.0
    %538 = vmatpush1.xpose.msra.mxu0 %v467
    %539 = vmatprep.subr.mxu0 0.0
    %540 = vmatpush1.xpose.msra.mxu0 %v470
    %541 = vmatprep.subr.mxu0 0.0
    %542 = vmatpush1.xpose.msra.mxu0 %v473
    %543 = vmatprep.subr.mxu0 0.0
    %544 = vmatpush1.xpose.msra.mxu0 %v476
    %545 = vmatprep.subr.mxu0 0.0
    %546 = vmatpush1.xpose.msra.mxu0 %v479
    %547 = vmatprep.subr.mxu0 0.0
    %548 = vmatpush1.xpose.msra.mxu0 %v482
    %549 = vmatprep.subr.mxu0 0.0
    %550 = vmatpush1.xpose.msra.mxu0 %v485
    %551 = vmatprep.mubr.f32.mxu0 0.0
    %552 = vmatmul.mubr.f32.gmra.mrb[0].mxu0 %v368
    %v553 = vpop.f32.mrb[0].mxu0
    %v554 = vadd.f32 %v329, %v553
    %v555 = vpop.f32.mrb[0].mxu0
    %v556 = vadd.f32 %v329, %v555
    %557 = vmatprep.mubr.f32.mxu0 0.0
    %558 = vmatmul.mubr.f32.gmra.mrb[0].mxu0 %v371
    %v559 = vpop.f32.mrb[0].mxu0
    %v560 = vadd.f32 %v334, %v559
    %v561 = vpop.f32.mrb[0].mxu0
    %v562 = vadd.f32 %v334, %v561
    %563 = vmatprep.mubr.f32.mxu0 0.0
    %564 = vmatmul.mubr.f32.gmra.mrb[0].mxu0 %v374
    %v565 = vpop.f32.mrb[0].mxu0
    %v566 = vadd.f32 %v339, %v565
    %v567 = vpop.f32.mrb[0].mxu0
    %v568 = vadd.f32 %v339, %v567
    %569 = vmatprep.mubr.f32.mxu0 0.0
    %570 = vmatmul.mubr.f32.gmra.mrb[0].mxu0 %v377
    %v571 = vpop.f32.mrb[0].mxu0
    %v572 = vadd.f32 %v344, %v571
    %v573 = vpop.f32.mrb[0].mxu0
    %v574 = vadd.f32 %v344, %v573
    %575 = vmatprep.mubr.f32.mxu0 0.0
    %576 = vmatmul.mubr.f32.gmra.mrb[0].mxu0 %v380
    %v577 = vpop.f32.mrb[0].mxu0
    %v578 = vadd.f32 %v349, %v577
    %v579 = vpop.f32.mrb[0].mxu0
    %v580 = vadd.f32 %v349, %v579
    %581 = vmatprep.mubr.f32.mxu0 0.0
    %582 = vmatmul.mubr.f32.gmra.mrb[0].mxu0 %v383
    %v583 = vpop.f32.mrb[0].mxu0
    %v584 = vadd.f32 %v354, %v583
    %v585 = vpop.f32.mrb[0].mxu0
    %v586 = vadd.f32 %v354, %v585
    %587 = vmatprep.mubr.f32.mxu0 0.0
    %588 = vmatmul.mubr.f32.gmra.mrb[0].mxu0 %v386
    %v589 = vpop.f32.mrb[0].mxu0
    %v590 = vadd.f32 %v359, %v589
    %v591 = vpop.f32.mrb[0].mxu0
    %v592 = vadd.f32 %v359, %v591
    %593 = vmatprep.mubr.f32.mxu0 0.0
    %594 = vmatmul.mubr.f32.gmra.mrb[0].mxu0 %v389
    %v595 = vpop.f32.mrb[0].mxu0
    %v596 = vadd.f32 %v364, %v595
    %v597 = vpop.f32.mrb[0].mxu0
    %v598 = vadd.f32 %v364, %v597
    %599 = vdwg.mxu0
    %v600 = vmax.f32 %v554, 0.0
    %v601 = vmax.f32 %v556, 0.0
    %v602 = vmax.f32 %v560, 0.0
    %v603 = vmax.f32 %v562, 0.0
    %v604 = vmax.f32 %v566, 0.0
    %v605 = vmax.f32 %v568, 0.0
    %v606 = vmax.f32 %v572, 0.0
    %v607 = vmax.f32 %v574, 0.0
    %v608 = vmax.f32 %v578, 0.0
    %v609 = vmax.f32 %v580, 0.0
    %v610 = vmax.f32 %v584, 0.0
    %v611 = vmax.f32 %v586, 0.0
    %v612 = vmax.f32 %v590, 0.0
    %v613 = vmax.f32 %v592, 0.0
    %v614 = vmax.f32 %v596, 0.0
    %v615 = vmax.f32 %v598, 0.0
    %616 = vset.pattern.permute.xlu0 1
    %617 = vperm.xlu0 %616, %v318
    %v618 = vpop.permute.xlu0 %617
    %620 = vset.pattern.permute.xlu0 1
    %621 = vperm.xlu0 %620, %v319
    %v622 = vpop.permute.xlu0 %621
    %624 = vset.pattern.permute.xlu0 1
    %625 = vperm.xlu0 %624, %v320
    %v626 = vpop.permute.xlu0 %625
    %628 = vset.pattern.permute.xlu0 1
    %629 = vperm.xlu0 %628, %v321
    %v630 = vpop.permute.xlu0 %629
    %632 = vset.pattern.permute.xlu0 1
    %633 = vperm.xlu0 %632, %v322
    %v634 = vpop.permute.xlu0 %633
    %636 = vset.pattern.permute.xlu0 1
    %637 = vperm.xlu0 %636, %v323
    %v638 = vpop.permute.xlu0 %637
    %640 = vset.pattern.permute.xlu0 1
    %641 = vperm.xlu0 %640, %v324
    %v642 = vpop.permute.xlu0 %641
    %644 = vset.pattern.permute.xlu0 1
    %645 = vperm.xlu0 %644, %v325
    %v646 = vpop.permute.xlu0 %645
    %v648 = vmul.f32 %v600, %v618
    %v649 = vmul.f32 %v601, %v618
    %v650 = vmul.f32 %v602, %v622
    %v651 = vmul.f32 %v603, %v622
    %v652 = vmul.f32 %v604, %v626
    %v653 = vmul.f32 %v605, %v626
    %v654 = vmul.f32 %v606, %v630
    %v655 = vmul.f32 %v607, %v630
    %v656 = vmul.f32 %v608, %v634
    %v657 = vmul.f32 %v609, %v634
    %v658 = vmul.f32 %v610, %v638
    %v659 = vmul.f32 %v611, %v638
    %v660 = vmul.f32 %v612, %v642
    %v661 = vmul.f32 %v613, %v642
    %v662 = vmul.f32 %v614, %v646
    %v663 = vmul.f32 %v615, %v646
    %v664 = vadd.f32 %v648, %v650
    %v665 = vadd.f32 %v664, %v652
    %v666 = vadd.f32 %v665, %v654
    %v667 = vadd.f32 %v666, %v656
    %v668 = vadd.f32 %v667, %v658
    %v669 = vadd.f32 %v668, %v660
    %v670 = vadd.f32 %v669, %v662
    %v671 = vrot.slane %v670, 4
    %v672 = vadd.f32 %v670, %v671
    %v673 = vrot.slane %v672, 2
    %v674 = vadd.f32 %v672, %v673
    %v675 = vrot.slane %v674, 1
    %v676 = vadd.f32 %v674, %v675
    %v677 = vadd.f32 %v649, %v651
    %v678 = vadd.f32 %v677, %v653
    %v679 = vadd.f32 %v678, %v655
    %v680 = vadd.f32 %v679, %v657
    %v681 = vadd.f32 %v680, %v659
    %v682 = vadd.f32 %v681, %v661
    %v683 = vadd.f32 %v682, %v663
    %v684 = vrot.slane %v683, 4
    %v685 = vadd.f32 %v683, %v684
    %v686 = vrot.slane %v685, 2
    %v687 = vadd.f32 %v685, %v686
    %v688 = vrot.slane %v687, 1
    %v689 = vadd.f32 %v687, %v688
    %s690 = sld [smem:[#allocation2]]
    %v691 = vstv %s690
    %v692 = vadd.f32 %v676, %v691
    %v693 = vadd.f32 %v689, %v691
    %v694 = vxor.u32 %v692, 2147483648
    %v695 = vxor.u32 %v693, 2147483648
    %v696 = vmul.f32 %v694, 1.442695
    %v697 = vpow.pop %v696
    %v698 = vmul.f32 %v695, 1.442695
    %v699 = vpow.pop %v698
    %v700 = vadd.f32 %v697, 1.0
    %v701 = vadd.f32 %v699, 1.0
    %v702 = vrcp.pop %v700
    %v703 = vmul.f32 1.0, %v702
    %v704 = vrcp.pop %v701
    %v705 = vmul.f32 1.0, %v704
    %v708 = vcombine.low %v703, %v705
    %v710 = vunpack.c.l.s4 1966171168
    %v711 = vunpack.c.0.s8 %v710
    %v712 = vlaneseq
    %v713 = vshrl.u32 %v712, 7
    %v714 = vsub.s32 %v711, %v713
    %v715 = vrot.slane %v708, %v714
    %v717 = vunpack.c.l.s4 1966171168
    %v718 = vunpack.c.0.s8 %v717
    %v719 = vlaneseq
    %v720 = vshrl.u32 %v719, 7
    %v721 = vsub.s32 %v718, %v720
    %v722 = vrot.slane %v715, %v721
    %v724 = vlaneseq
    %vm725 = vcmp.ge.s32.totalorder %v724, 0
    %vm726 = vcmp.lt.s32.totalorder %v724, 256
    %vm727 = vmand %vm725, %vm726
    %728 = vst.msk [vmem:[#allocation3] sm:$0x3] %vm727, %v722
    // Predicated region
    $region22: #{tpu_custom_call.1} parent=1 // pred_check
      _
    $region23: #{tpu_custom_call.1} parent=1 // pred_check_branch
      %730 = sbr.rel (0) target = $region25
    $region24: #{tpu_custom_call.1} parent=1 // pred_region
      %s732 = ssub.s32 32, 32
      %733 = vsyncadd [#allocation4], %s732
      %s735 = sshll.u32 [#allocation3], 4
      %s736 = int_to_ptr.vmem [resolvable:$true] %s735
      %738 = dma.vmem_to_hbm [thread:$0]  %s736, 32, %s5, [#allocation4]
    $region25: #{tpu_custom_call.1} parent=1 // pred_fallthru
      _
    // Predicated region
    $region26: #{tpu_custom_call.1} parent=1 // pred_check
      _
    $region27: #{tpu_custom_call.1} parent=1 // pred_check_branch
      %740 = sbr.rel (0) target = $region29
    $region28: #{tpu_custom_call.1} parent=1 // pred_region
      %741 = dma.done [#allocation4], 32
    $region29: #{tpu_custom_call.1} parent=1 // pred_fallthru
      _
    %742 = vsyncpa [#allocation4], 1

</llo_original>
